<compile_context>
chip_gen: v6e
topology: v6e:2x2x1
jax: 0.10.0
libtpu: 0.0.40
codegen_flags: <defaults>
</compile_context>

<pallas_src>
import jax
import jax.numpy as jnp
from jax.experimental import pallas as pl
from jax.experimental.pallas import tpu as pltpu


def _time_embedding_kernel(pos_ref, fp_ref, pe_ref):
    # pos_ref: (TILE, 1) f32
    # fp_ref:  (2, D) f32   row 0 = interleaved inverse frequencies,
    #                       row 1 = phase (0 on even lanes, pi/2 on odd lanes)
    # pe_ref:  (TILE, D) out dtype
    inv_freq = fp_ref[0:1, :]                    # (1, D)
    phase = fp_ref[1:2, :]                       # (1, D)
    # cos(x) == sin(x + pi/2) -> exactly one sine per output element.
    angle = pos_ref[...] * inv_freq + phase      # (TILE, D) f32
    pe_ref[...] = jnp.sin(angle).astype(pe_ref.dtype)


def _round_up(x, m):
    return ((x + m - 1) // m) * m


def time_embedding(pos, d_model=128, tile_rows=4096, out_dtype=jnp.float32):
    """pos: (B, T) float array -> (B, T, d_model) time embedding."""
    assert d_model % 2 == 0, "d_model must be even (sin/cos interleave)"
    B, T = pos.shape
    N = B * T

    # Row tile over the flattened B*T axis:
    #   - sublane aligned (multiple of 8),
    #   - at most tile_rows (VMEM budget, see header),
    #   - at most ~N/2 so the grid has >= 2 steps and both v7x TensorCores
    #     get work under dimension_semantics=("parallel",).
    tile = max(8, _round_up(min(tile_rows, pl.cdiv(N, 2)), 8))
    grid = (pl.cdiv(N, tile),)   # last block may be partial; writeback is clipped

    pos_flat = pos.astype(jnp.float32).reshape(N, 1)   # free reshape, no pad

    # Hoisted constants, fused into one (2, d_model) broadcast input.
    half = jnp.arange(0, d_model, 2, dtype=jnp.float32) / jnp.float32(d_model)
    div_term = 1.0 / jnp.power(jnp.float32(10000.0), half)              # (D/2,)
    inv_freq = jnp.repeat(div_term, 2)                                  # (D,) interleaved
    phase = jnp.tile(jnp.array([0.0, jnp.pi / 2.0], jnp.float32),
                     d_model // 2)                                      # (D,)
    freq_phase = jnp.stack([inv_freq, phase], axis=0)                   # (2, D)

    out_itemsize = jnp.dtype(out_dtype).itemsize
    cost = pl.CostEstimate(
        flops=2 * N * d_model,                       # one mul + one add per element
        transcendentals=N * d_model,                 # one sin per element (advisory)
        bytes_accessed=4 * N + 4 * 2 * d_model + N * d_model * out_itemsize,
    )

    pe_flat = pl.pallas_call(
        _time_embedding_kernel,
        out_shape=jax.ShapeDtypeStruct((N, d_model), out_dtype),
        grid_spec=pl.GridSpec(
            grid=grid,
            in_specs=[
                pl.BlockSpec((tile, 1), lambda i: (i, 0)),          # pos rows
                pl.BlockSpec((2, d_model), lambda i: (0, 0)),       # freq/phase (broadcast)
            ],
            out_specs=pl.BlockSpec((tile, d_model), lambda i: (i, 0)),
        ),
        compiler_params=pltpu.CompilerParams(
            dimension_semantics=("parallel",)),                     # megacore-shardable
        cost_estimate=cost,
    )(pos_flat, freq_phase)

    return pe_flat.reshape(B, T, d_model)


def _reference(pos, d_model=128):
    # Pure-JAX reference mirroring the PyTorch module.
    pos = pos.astype(jnp.float32)
    div_term = 1.0 / jnp.power(10000.0,
                               jnp.arange(0, d_model, 2, dtype=jnp.float32) / d_model)
    ang = pos[..., None] * div_term  # (B, T, d_model/2)
    pe = jnp.zeros(pos.shape + (d_model,), jnp.float32)
    pe = pe.at[..., 0::2].set(jnp.sin(ang))
    pe = pe.at[..., 1::2].set(jnp.cos(ang))
    return pe


if __name__ == "__main__":
    key = jax.random.PRNGKey(0)
    B, T, D = 2, 8, 128
    # diffusion timesteps: small non-negative values
    pos = jax.random.uniform(key, (B, T), jnp.float32, minval=0.0, maxval=50.0)

    pe = jax.block_until_ready(time_embedding(pos, d_model=D))
    ref = _reference(pos, d_model=D)

    assert pe.shape == (B, T, D)
    assert pe.dtype == jnp.float32
    assert jnp.allclose(pe, ref, atol=1e-5, rtol=1e-5)

    print("KERNEL_OK")
</pallas_src>

<mosaic_0001>
module attributes {stable_mosaic.version = 11 : i64} {
  func.func @_time_embedding_kernel(%arg0: i32, %arg1: memref<8x1xf32, #tpu.memory_space<vmem>>, %arg2: memref<2x128xf32, #tpu.memory_space<vmem>>, %arg3: memref<8x128xf32, #tpu.memory_space<vmem>>) attributes {dimension_semantics = [#tpu.dimension_semantics<parallel>], iteration_bounds = array<i64: 2>, scalar_prefetch = 0 : i64, scratch_operands = 0 : i64, tpu.core_type = #tpu.core_type<tc>, window_params = [{transform_indices = @transform_0, window_bounds = array<i64: 8, 1>}, {pipeline_mode = #tpu.pipeline_mode<synchronous>, transform_indices = @transform_1, window_bounds = array<i64: 2, 128>}, {transform_indices = @transform_2, window_bounds = array<i64: 8, 128>}]} {
    %c0 = arith.constant 0 : index
    %c0_0 = arith.constant 0 : index
    %0 = vector.load %arg2[%c0, %c0_0] : memref<2x128xf32, #tpu.memory_space<vmem>>, vector<1x128xf32>
    %c1 = arith.constant 1 : index
    %c0_1 = arith.constant 0 : index
    %1 = vector.load %arg2[%c1, %c0_1] : memref<2x128xf32, #tpu.memory_space<vmem>>, vector<1x128xf32>
    %c0_2 = arith.constant 0 : index
    %c0_3 = arith.constant 0 : index
    %2 = vector.load %arg1[%c0_2, %c0_3] : memref<8x1xf32, #tpu.memory_space<vmem>>, vector<8x1xf32>
    %3 = vector.broadcast %2 : vector<8x1xf32> to vector<8x128xf32>
    %4 = vector.broadcast %0 : vector<1x128xf32> to vector<8x128xf32>
    %5 = arith.mulf %3, %4 : vector<8x128xf32>
    %6 = vector.broadcast %1 : vector<1x128xf32> to vector<8x128xf32>
    %7 = arith.addf %5, %6 : vector<8x128xf32>
    %8 = math.sin %7 : vector<8x128xf32>
    %c0_4 = arith.constant 0 : index
    %c0_5 = arith.constant 0 : index
    %9 = vector.load %arg3[%c0_4, %c0_5] : memref<8x128xf32, #tpu.memory_space<vmem>>, vector<8x128xf32>
    tpu.vector_store %arg3[%c0_4, %c0_5], %8 {strides = array<i32>} : memref<8x128xf32, #tpu.memory_space<vmem>>, vector<8x128xf32>,
    return
  }
  func.func @transform_0(%arg0: i32) -> (i32, i32) {
    %c0_i32 = arith.constant 0 : i32
    %c0_i32_0 = arith.constant 0 : i32
    return %arg0, %c0_i32 : i32, i32
  }
  func.func @transform_1(%arg0: i32) -> (i32, i32) {
    %c0_i32 = arith.constant 0 : i32
    %c0_i32_0 = arith.constant 0 : i32
    %c0_i32_1 = arith.constant 0 : i32
    return %c0_i32, %c0_i32_0 : i32, i32
  }
  func.func @transform_2(%arg0: i32) -> (i32, i32) {
    %c0_i32 = arith.constant 0 : i32
    %c0_i32_0 = arith.constant 0 : i32
    return %arg0, %c0_i32 : i32, i32
  }
}

</mosaic_0001>

<llo_original>
// kernel: tpu_custom_call.1
$region0: #{tpu_custom_call.1}
  #allocation0 [shape = 'u32[]', space=smem, size = 0x4, offset = 0x4, fixed_abs, tag = 'smem constant byte address 0x4 - core index']
  #allocation1 [shape = 'u32[144,128]{1,0:T(1,128)}', space=vmem, size = 0x12000, scoped, tag = 'internal scratch']
  %s0 = inlined_call_operand.vmem [shape: f32[16,1], index: 0, kind: input, shape index: {}]
  %s1 = inlined_call_operand.vmem [shape: f32[2,128], index: 1, kind: input, shape index: {}]
  %s2 = inlined_call_operand.hbm [shape: f32[16,128], index: 2, kind: output, shape index: {}]
  %s3 = sld [smem:[#allocation0]]
  $region41: #{tpu_custom_call.1} parent=0
    _
  %s5 = ssub.s32 1, %s3
  %s6 = scalar_select 0, %s5, %s3
  $region1: #{tpu_custom_call.1} parent=0
    #allocation2 [shape = 'u8[8192]{0}', space=vmem, size = 0x2000, scoped, tag = 'output window, operand 0']
    #allocation3 [shape = 's32[2]{0}', space=sflag, size = 0x8, scoped, tag = 'scoped memory for tpu_custom_call.1']
    %7 = vsyncpa [#allocation3], 0
    %s8 = scalar_lea.sflag [#allocation3], 1
    %9 = vsyncpa %s8, 0
    loop: start=0, step=1, limit=4
    $region2: #{tpu_custom_call.1} parent=1 // loop_pre_header
      _
    $region3: #{tpu_custom_call.1} parent=1 // loop_header
      %s11 = sphi 0, %s15
      %p12 = scmp.ge.s32.totalorder %s11, 4
      %s21 = sphi 0, %s23
      %s24 = sphi 0, %s21
      %s25 = sphi 0, %s24
      %s41 = sphi 0, %s25
      %s45 = sphi 0, %s45
      %s47 = sphi 0, %s45
      %s48 = sphi 0, %s47
      %s62 = sphi 0, %s48
      %s68 = sphi 0, %s70
      %s71 = sphi 0, %s68
      %s72 = sphi 0, %s71
      %s88 = sphi 0, %s72
    $region4: #{tpu_custom_call.1} parent=1 // loop_header_branch
      %14 = sbr.rel (%p12) target = $region8
    $region5: #{tpu_custom_call.1} parent=1 // loop_body
      %s16 = ssub.s32 %s11, 1
      %s17 = ssub.s32 %s11, 2
      %s18 = sadd.s32 %s11, 1
      %s19 = ssub.s32 %s11, %s18
      %p20 = scmp.eq.s32.totalorder %s19, 0
      %s22 = sadd.s32 %s21, 1
      %s23 = scalar_select %p20, %s21, %s22
      %p26 = pneg %p20
      %p27 = scmp.eq.s32.totalorder %s11, 1
      %p28 = por %p26, %p27
      %p29 = scmp.ne.s32.totalorder %s21, %s24
      %p30 = scmp.eq.s32.totalorder %s11, 0
      %p31 = por %p29, %p30
      %p32 = scmp.ne.s32.totalorder %s21, %s24
      %p33 = scmp.eq.s32.totalorder %s16, 1
      %p34 = por %p32, %p33
      %p35 = scmp.ne.s32.totalorder %s24, %s25
      %p36 = scmp.eq.s32.totalorder %s16, 0
      %p37 = por %p35, %p36
      %p38 = scmp.ne.s32.totalorder %s24, %s25
      %p39 = scmp.eq.s32.totalorder %s17, 1
      %p40 = por %p38, %p39
      %p42 = scmp.ne.s32.totalorder %s25, %s41
      %p43 = scmp.eq.s32.totalorder %s17, 0
      %p44 = por %p42, %p43
      %s46 = sadd.s32 %s45, 1
      %p49 = scmp.eq.s32.totalorder %s11, 1
      %p50 = scmp.ne.s32.totalorder %s45, %s47
      %p51 = scmp.eq.s32.totalorder %s11, 0
      %p52 = por %p50, %p51
      %p53 = scmp.ne.s32.totalorder %s45, %s47
      %p54 = scmp.eq.s32.totalorder %s16, 1
      %p55 = por %p53, %p54
      %p56 = scmp.ne.s32.totalorder %s47, %s48
      %p57 = scmp.eq.s32.totalorder %s16, 0
      %p58 = por %p56, %p57
      %p59 = scmp.ne.s32.totalorder %s47, %s48
      %p60 = scmp.eq.s32.totalorder %s17, 1
      %p61 = por %p59, %p60
      %p63 = scmp.ne.s32.totalorder %s48, %s62
      %p64 = scmp.eq.s32.totalorder %s17, 0
      %p65 = por %p63, %p64
      %s66 = ssub.s32 %s11, %s18
      %p67 = scmp.eq.s32.totalorder %s66, 0
      %s69 = sadd.s32 %s68, 1
      %s70 = scalar_select %p67, %s68, %s69
      %p73 = pneg %p67
      %p74 = scmp.eq.s32.totalorder %s11, 1
      %p75 = por %p73, %p74
      %p76 = scmp.ne.s32.totalorder %s68, %s71
      %p77 = scmp.eq.s32.totalorder %s11, 0
      %p78 = por %p76, %p77
      %p79 = scmp.ne.s32.totalorder %s68, %s71
      %p80 = scmp.eq.s32.totalorder %s16, 1
      %p81 = por %p79, %p80
      %p82 = scmp.ne.s32.totalorder %s71, %s72
      %p83 = scmp.eq.s32.totalorder %s16, 0
      %p84 = por %p82, %p83
      %p85 = scmp.ne.s32.totalorder %s71, %s72
      %p86 = scmp.eq.s32.totalorder %s17, 1
      %p87 = por %p85, %p86
      %p89 = scmp.ne.s32.totalorder %s72, %s88
      %p90 = scmp.eq.s32.totalorder %s17, 0
      %p91 = por %p89, %p90
      %p92 = scmp.le.s32.totalorder 1, %s11
      %p93 = scmp.lt.s32.totalorder %s11, 3
      %p94 = pnand %p92, %p93
      %p95 = pneg %p94
      // Predicated region
      $region9: #{tpu_custom_call.1} parent=5 // pred_check
        _
      $region10: #{tpu_custom_call.1} parent=5 // pred_check_branch
        %97 = sbr.rel (%p94) target = $region12
      $region11: #{tpu_custom_call.1} parent=5 // pred_region
        %s98 = ssub.s32 %s11, 1
        // Predicated region
        $region13: #{tpu_custom_call.1} parent=11 // pred_check
          %p99 = pneg %p58
        $region14: #{tpu_custom_call.1} parent=11 // pred_check_branch
          %101 = sbr.rel (%p99) target = $region16
        $region15: #{tpu_custom_call.1} parent=11 // pred_region
          _
        $region16: #{tpu_custom_call.1} parent=11 // pred_fallthru
          _
      $region12: #{tpu_custom_call.1} parent=5 // pred_fallthru
        _
      %p102 = scmp.lt.s32.totalorder %s11, 2
      // Predicated region
      $region17: #{tpu_custom_call.1} parent=5 // pred_check
        %p103 = pneg %p102
      $region18: #{tpu_custom_call.1} parent=5 // pred_check_branch
        %105 = sbr.rel (%p103) target = $region20
      $region19: #{tpu_custom_call.1} parent=5 // pred_region
        // Predicated region
        $region21: #{tpu_custom_call.1} parent=19 // pred_check
          %p106 = pneg %p31
        $region22: #{tpu_custom_call.1} parent=19 // pred_check_branch
          %108 = sbr.rel (%p106) target = $region24
        $region23: #{tpu_custom_call.1} parent=19 // pred_region
          %p109 = scmp.lt.s32.totalorder %s11, 1
          %s110 = scalar_select %p109, %s11, 1
          %s111 = smul.addr %s110, 8
          %s112 = scalar_lea.vmem %s0, %s111
        $region24: #{tpu_custom_call.1} parent=19 // pred_fallthru
          _
      $region20: #{tpu_custom_call.1} parent=5 // pred_fallthru
        _
      %p113 = scmp.le.s32.totalorder 1, %s11
      %p114 = scmp.lt.s32.totalorder %s11, 3
      %p115 = pnand %p113, %p114
      %p116 = pneg %p115
      // Predicated region
      $region25: #{tpu_custom_call.1} parent=5 // pred_check
        _
      $region26: #{tpu_custom_call.1} parent=5 // pred_check_branch
        %118 = sbr.rel (%p115) target = $region28
      $region27: #{tpu_custom_call.1} parent=5 // pred_region
        %s119 = ssub.s32 %s11, 1
        %p120 = scmp.lt.s32.totalorder %s16, 1
        %s121 = scalar_select %p120, %s16, 1
        %s122 = smul.addr %s121, 8
        %s123 = scalar_lea.vmem %s0, %s122
        %p124 = pneg %p37
        %p125 = pneg %p34
        %p126 = pneg %p58
        %p127 = pneg %p55
        %p128 = pneg %p84
        %p129 = pneg %p81
        %s130 = sand.u32 %s71, 1
        %s131 = scalar_lea.sflag [#allocation3], %s130
        %s132 = sand.u32 %s71, 1
        %s133 = smul.addr %s132, 8
        %s134 = scalar_lea.vmem [#allocation2], %s133
        %p135 = scmp.lt.s32.totalorder %s16, 1
        %s136 = scalar_select %p135, %s16, 1
        %s137 = smul.addr %s136, 8
        %s138 = scalar_lea.vmem %s0, %s137
        %v139 = vld [vmem:[%s1] sm:$0x1]
        %v140 = vld [vmem:[%s1 + $0x1] sm:$0x1]
        %v141 = vld [vmem:[%s138] sm:$0xff]
        %143 = vset.pattern.permute.xlu0 0
        %144 = vperm.xlu0 %143, %v141
        %v145 = vpop.permute.xlu0 %144
        %v147 = vlaneseq
        %v148 = vshrl.u32 %v147, 7
        %v149 = vsub.s32 0, %v148
        %v150 = vrot.slane %v139, %v149
        %v151 = vmul.f32 %v145, %v150
        %v152 = vlaneseq
        %v153 = vshrl.u32 %v152, 7
        %v154 = vsub.s32 0, %v153
        %v155 = vrot.slane %v140, %v154
        %v156 = vadd.f32 %v151, %v155
        %v157 = vand.u32 2147483647, %v156
        %vm158 = vcmp.le.f32.partialorder %v157, 0.7853982
        %vm159 = vcmp.lt.s32.totalorder %v156, 0
        %v160 = vand.u32 %v156, 2139095040
        %v161 = vshrl.u32 %v160, 23
        %v162 = vsub.s32 %v161, 127
        %v163 = vand.u32 2147483647, %v156
        %v164 = vand.u32 %v163, 8388607
        %v165 = vor.u32 %v164, 8388608
        %v166 = vsub.s32 0, %v165
        %v167 = vadd.s32 %v162, 1
        %vm168 = vcmp.gt.s32.totalorder %v167, 0
        %v169 = vsel %vm168, %v167, 0
        %v170 = vshrl.u32 %v169, 5
        %v171 = vand.u32 %v169, 31
        %v172 = vsub.s32 32, %v171
        %v173 = vshrl.u32 683565275, %v172
        %v174 = vshll.u32 683565275, %v171
        %v175 = vshrl.u32 2475754826, %v172
        %v176 = vor.u32 %v174, %v175
        %v177 = vshll.u32 2475754826, %v171
        %v178 = vshrl.u32 2131351028, %v172
        %v179 = vor.u32 %v177, %v178
        %v180 = vshll.u32 2131351028, %v171
        %v181 = vshrl.u32 2102212464, %v172
        %v182 = vor.u32 %v180, %v181
        %v183 = vshll.u32 2102212464, %v171
        %v184 = vshrl.u32 920167782, %v172
        %v185 = vor.u32 %v183, %v184
        %v186 = vshll.u32 920167782, %v171
        %v187 = vshrl.u32 1326507024, %v172
        %v188 = vor.u32 %v186, %v187
        %vm189 = vcmp.lt.s32.totalorder %v170, 1
        %vm190 = vcmp.lt.s32.totalorder %v170, 2
        %vm191 = vcmp.lt.s32.totalorder %v170, 3
        %vm192 = vcmp.lt.s32.totalorder %v170, 4
        %v193 = vsel %vm189, %v173, %v176
        %v194 = vsel %vm192, %v182, 2102212464
        %v195 = vsel %vm191, %v179, %v194
        %v196 = vsel %vm190, %v193, %v195
        %v197 = vsel %vm189, %v176, %v179
        %v198 = vsel %vm192, %v185, 920167782
        %v199 = vsel %vm191, %v182, %v198
        %v200 = vsel %vm190, %v197, %v199
        %v201 = vsel %vm189, %v179, %v182
        %v202 = vsel %vm192, %v188, 1326507024
        %v203 = vsel %vm191, %v185, %v202
        %v204 = vsel %vm190, %v201, %v203
        %v205 = vshll.u32 %v165, 8
        %v206 = vmul.u32.u64.compose %v205, %v204
        %v207 = vextract.low.u32 %v206
        %v208 = vextract.high.u32 %v206
        %v209 = vmul.u32.u64.compose %v205, %v200
        %v210 = vextract.low.u32 %v209
        %v211 = vextract.high.u32 %v209
        %v212 = vmul.u32 %v205, %v196
        %v213 = vadd.s32 %v208, %v210
        %vm214 = vc.u32 %v208, %v210
        %v215 = vadd.s32 %v211, 1
        %v216 = vsel %vm214, %v215, %v211
        %v217 = vadd.s32 %v212, %v216
        %v218 = vadd.s32 %v217, 536870912
        %v219 = vshrl.u32 %v218, 30
        %v220 = vshll.u32 %v219, 30
        %v221 = vsub.s32 %v217, %v220
        %vm222 = vcmp.lt.s32.totalorder %v221, 0
        %v223 = vsub.s32 0, %v221
        %v224 = vsel %vm222, %v223, %v221
        %v225 = vclz %v224
        %v226 = vsub.s32 %v225, 2
        %vm227 = vcmp.gt.s32.totalorder 0, %v226
        %v228 = vsel %vm227, 0, %v226
        %v229 = vsub.s32 32, %v228
        %v230 = vshll.u32 %v221, %v228
        %v231 = vshrl.u32 %v213, %v229
        %v232 = vor.u32 %v230, %v231
        %v233 = vsub.s32 4294967266, %v228
        %v234 = vadd.s32 %v233, 127
        %v235 = vshll.u32 %v234, 23
        %v236 = vor.u32 4788187, %v235
        %v237 = vand.u32 2147483647, %v236
        %v239 = vcvt.s32.f32 %v232
        %v240 = vmul.f32 %v239, %v237
        %v241 = vxor.u32 %v240, 2147483648
        %v242 = vsel %vm159, %v241, %v240
        %v243 = vsub.s32 4, %v219
        %v244 = vsel %vm159, %v243, %v219
        %v245 = vsel %vm158, %v156, %v242
        %v246 = vsel %vm158, 0, %v244
        %v247 = vcosq.f32.pop %v245
        %v248 = vsinq.f32.pop %v245
        %vm249 = vweird.f32 %v156
        %v250 = vadd.s32 %v246, 3
        %v251 = vand.u32 %v250, 3
        %vm252 = vcmp.lt.s32.totalorder %v251, 2
        %vm253 = vcmp.eq.s32.totalorder %v251, 0
        %v254 = vxor.u32 %v248, 2147483648
        %v255 = vsel %vm253, %v247, %v254
        %vm256 = vcmp.eq.s32.totalorder %v251, 2
        %v257 = vxor.u32 %v247, 2147483648
        %v258 = vsel %vm256, %v257, %v248
        %v259 = vsel %vm252, %v255, %v258
        %v260 = vsel %vm249, nan, %v259
        %261 = vst [vmem:[%s134] sm:$0xff] %v260
        %s262 = sand.u32 %s71, 1
        %s263 = scalar_lea.sflag [#allocation3], %s262
        %s264 = sand.u32 %s71, 1
        %s265 = smul.addr %s264, 8
        %s266 = scalar_lea.vmem [#allocation2], %s265
        // Predicated region
        $region29: #{tpu_custom_call.1} parent=27 // pred_check
          %p267 = pneg %p81
        $region30: #{tpu_custom_call.1} parent=27 // pred_check_branch
          %269 = sbr.rel (%p267) target = $region32
        $region31: #{tpu_custom_call.1} parent=27 // pred_region
          %s271 = ssub.s32 128, 128
          %272 = vsyncadd %s263, %s271
          %s273 = smul.addr %s16, 128
          %s274 = scalar_lea.hbm %s2, %s273
          %s276 = sshll.u32 %s266, 4
          %s277 = int_to_ptr.vmem [resolvable:$true] %s276
          %279 = dma.vmem_to_hbm [thread:$0]  %s277, 128, %s274, %s263
        $region32: #{tpu_custom_call.1} parent=27 // pred_fallthru
          _
      $region28: #{tpu_custom_call.1} parent=5 // pred_fallthru
        _
      %p280 = scmp.le.s32.totalorder 2, %s11
      // Predicated region
      $region33: #{tpu_custom_call.1} parent=5 // pred_check
        %p281 = pneg %p280
      $region34: #{tpu_custom_call.1} parent=5 // pred_check_branch
        %283 = sbr.rel (%p281) target = $region36
      $region35: #{tpu_custom_call.1} parent=5 // pred_region
        %s284 = ssub.s32 %s11, 2
        // Predicated region
        $region37: #{tpu_custom_call.1} parent=35 // pred_check
          %p285 = pneg %p87
        $region38: #{tpu_custom_call.1} parent=35 // pred_check_branch
          %287 = sbr.rel (%p285) target = $region40
        $region39: #{tpu_custom_call.1} parent=35 // pred_region
          %s288 = sand.u32 %s72, 1
          %s289 = scalar_lea.sflag [#allocation3], %s288
          %s290 = sand.u32 %s72, 1
          %s291 = smul.addr %s290, 8
          %s292 = scalar_lea.vmem [#allocation2], %s291
          %293 = dma.done %s289, 128
        $region40: #{tpu_custom_call.1} parent=35 // pred_fallthru
          _
      $region36: #{tpu_custom_call.1} parent=5 // pred_fallthru
        _
    $region6: #{tpu_custom_call.1} parent=1 // loop_footer
      %s15 = sadd.s32 1, %s11
    $region7: #{tpu_custom_call.1} parent=1 // loop_footer_branch
      %10 = sbr.rel target = $region3
    $region8: #{tpu_custom_call.1} parent=1 // loop_exit
      _
    %294 = vsyncpa [#allocation3], 1
    %s295 = scalar_lea.sflag [#allocation3], 1
    %296 = vsyncpa %s295, 1

</llo_original>
